<compile_context>
chip_gen: v7x
topology: tpu7x:2x2x1
jax: 0.10.0
libtpu: 0.0.40
codegen_flags: <defaults>
</compile_context>

<pallas_src>
import math

import jax
import jax.numpy as jnp
from jax import lax
from jax.experimental import pallas as pl
from jax.experimental.pallas import tpu as pltpu


def _round_up(x, m):
    return ((x + m - 1) // m) * m


def _vmem_plan():
    """Return (per-tile byte budget, vmem_limit_bytes override or None)."""
    try:
        kind = jax.devices()[0].device_kind.lower()
    except Exception:  # pragma: no cover - defensive
        kind = ""
    if "v6" in kind:          # 128 MiB physical VMEM: amortize per-step overhead
        return 8 << 20, 64 << 20
    if "v7" in kind:          # 64 MiB physical per TC: big tiles, keep headroom
        return 6 << 20, 48 << 20
    # v5e / unknown: 2 inputs x 2 pipeline buffers x 2 MiB = 8 MiB working set,
    # safely under the 16 MiB default scoped-VMEM limit.
    return 2 << 20, None


def _choose_tile_rows(n_rows, width, budget_bytes):
    """Largest row tile (multiple of 8) whose f32 block fits the budget,
    balanced so padding waste stays small when several tiles are needed."""
    bytes_per_row = width * 4
    max_rows = max(8, ((budget_bytes // bytes_per_row) // 8) * 8)
    if n_rows <= max_rows:
        return _round_up(n_rows, 8)
    num_tiles = -(-n_rows // max_rows)
    return _round_up(-(-n_rows // num_tiles), 8)


def _tile_loss(st, ev, cos_step, *, k, d, n_valid, tile_rows, need_mask,
               n_idx):
    """Loss contribution of one (tile_rows, k*d) tile.

    Each lane row packs k original embedding rows of length d.  F.normalize
    (eps=1e-12) semantics: x / max(||x||, eps) == x * rsqrt(max(||x||^2, e^2)).
    """
    prod = st * ev                                   # (tile_rows, k*d)
    sqe = ev * ev                                    # (tile_rows, k*d)
    if need_mask:
        row = (lax.broadcasted_iota(jnp.int32, (tile_rows, 1), 0)
               + n_idx * tile_rows)                  # folded-row index
    total = jnp.float32(0.0)
    for g in range(k):                               # static unroll, k = 128//d
        lo = g * d
        dot = jnp.sum(prod[:, lo:lo + d], axis=-1, keepdims=True)
        sq = jnp.sum(sqe[:, lo:lo + d], axis=-1, keepdims=True)
        sim = dot * lax.rsqrt(jnp.maximum(sq, 1e-24))
        contrib = jnp.maximum(cos_step - sim, 0.0)   # sum(relu(cos - sim))
        if need_mask:
            contrib = jnp.where(row * k + g < n_valid, contrib, 0.0)
        total = total + jnp.sum(contrib)
    return total


def _make_last_step_kernel(*, cos_step, k, d, n_valid, tile_rows, need_mask,
                           evolve_3d):
    cos_step = float(cos_step)  # Python static -> f32 constant in the kernel

    def kernel(static_ref, evolve_ref, out_ref):
        ev = evolve_ref[0] if evolve_3d else evolve_ref[...]
        total = _tile_loss(static_ref[...], ev, cos_step, k=k, d=d,
                           n_valid=n_valid, tile_rows=tile_rows,
                           need_mask=need_mask, n_idx=pl.program_id(0))
        # Per-tile partial sum, broadcast over a lane-dense (1, 8, 128) block.
        out_ref[...] = jnp.full(out_ref.shape, total, dtype=out_ref.dtype)

    return kernel


def _make_sum_kernel(*, k, d, n_valid, tile_rows, need_mask):
    def kernel(cos_ref, static_ref, evolve_ref, out_ref):
        t = pl.program_id(1)

        @pl.when(t == 0)
        def _():
            out_ref[...] = jnp.zeros_like(out_ref)

        total = _tile_loss(static_ref[...], evolve_ref[0], cos_ref[t], k=k,
                           d=d, n_valid=n_valid, tile_rows=tile_rows,
                           need_mask=need_mask, n_idx=pl.program_id(0))
        out_ref[...] += jnp.full(out_ref.shape, total, dtype=out_ref.dtype)

    return kernel


def static_regularizer_loss(evolve_embs, static_emb, *, angle, discount,
                            sum_over_time=False, vmem_budget_bytes=None):
    """evolve_embs: [T, N, D] f32, static_emb: [N, D] f32 -> scalar f32 loss.

    Default (sum_over_time=False) mirrors the PyTorch loop exactly: only the
    last time step contributes ("last step wins").  sum_over_time=True sums
    the per-step losses instead (kept behind a flag, see upstream intent).
    """
    evolve_embs = jnp.asarray(evolve_embs, jnp.float32)
    static_emb = jnp.asarray(static_emb, jnp.float32)
    T, N, D = evolve_embs.shape
    assert static_emb.shape == (N, D)

    rad = math.radians(float(angle))
    cos_all = [math.cos(rad * (t * float(discount) + 1.0)) for t in range(T)]

    # Lane folding: pack k original rows into one dense 128-lane row.
    k = 128 // D if (D < 128 and 128 % D == 0) else 1
    width = k * D

    budget, vmem_limit = _vmem_plan()
    if vmem_budget_bytes is not None:
        budget = int(vmem_budget_bytes)

    n_rows = -(-N // k)                               # folded rows required
    tile_rows = _choose_tile_rows(n_rows, width, budget)
    num_tiles = -(-n_rows // tile_rows)
    rows_pad = num_tiles * tile_rows
    n_pad_rows = rows_pad * k - N                     # padded ORIGINAL rows
    need_mask = n_pad_rows > 0

    def _prep2d(x):                                   # (N, D) -> (rows_pad, width)
        if n_pad_rows:
            x = jnp.pad(x, ((0, n_pad_rows), (0, 0)))
        return x.reshape(rows_pad, width)

    static2d = _prep2d(static_emb)

    extra = {"vmem_limit_bytes": vmem_limit} if vmem_limit else {}
    out_shape = jax.ShapeDtypeStruct((num_tiles, 8, 128), jnp.float32)
    out_bytes = num_tiles * 8 * 128 * 4

    if not sum_over_time:
        # Faithful semantics: only t = T-1 survives -> single-axis grid, no
        # scalar prefetch, cos baked in as a closure constant.
        if need_mask:
            ev = _prep2d(evolve_embs[T - 1])
            ev_spec = pl.BlockSpec((tile_rows, width), lambda n: (n, 0))
            evolve_3d = False
        else:
            # No padding needed: keep [T, rows, width] in HBM and DMA only the
            # last time slice (no wrapper copy of the history).
            ev = evolve_embs.reshape(T, rows_pad, width)
            ev_spec = pl.BlockSpec((1, tile_rows, width),
                                   lambda n: (T - 1, n, 0))
            evolve_3d = True
        kern = _make_last_step_kernel(cos_step=cos_all[-1], k=k, d=D,
                                      n_valid=N, tile_rows=tile_rows,
                                      need_mask=need_mask, evolve_3d=evolve_3d)
        out = pl.pallas_call(
            kern,
            out_shape=out_shape,
            grid=(num_tiles,),
            in_specs=[pl.BlockSpec((tile_rows, width), lambda n: (n, 0)),
                      ev_spec],
            out_specs=pl.BlockSpec((1, 8, 128), lambda n: (n, 0, 0)),
            compiler_params=pltpu.CompilerParams(
                dimension_semantics=("parallel",), **extra),
            cost_estimate=pl.CostEstimate(
                flops=4 * rows_pad * width,
                transcendentals=rows_pad * k,
                bytes_accessed=8 * rows_pad * width + out_bytes),
        )(static2d, ev)
    else:
        cos_steps = jnp.asarray(cos_all, dtype=jnp.float32)
        ev = evolve_embs
        if n_pad_rows:
            ev = jnp.pad(ev, ((0, 0), (0, n_pad_rows), (0, 0)))
        ev = ev.reshape(T, rows_pad, width)
        kern = _make_sum_kernel(k=k, d=D, n_valid=N, tile_rows=tile_rows,
                                need_mask=need_mask)
        out = pl.pallas_call(
            kern,
            out_shape=out_shape,
            grid_spec=pltpu.PrefetchScalarGridSpec(
                num_scalar_prefetch=1,                # cos_steps -> SMEM
                grid=(num_tiles, T),                  # N tiles outer, time inner
                in_specs=[
                    pl.BlockSpec((tile_rows, width),
                                 lambda n, t, cos: (n, 0)),
                    pl.BlockSpec((1, tile_rows, width),
                                 lambda n, t, cos: (t, n, 0)),
                ],
                out_specs=pl.BlockSpec((1, 8, 128),
                                       lambda n, t, cos: (n, 0, 0)),
            ),
            compiler_params=pltpu.CompilerParams(
                dimension_semantics=("parallel", "arbitrary"), **extra),
            cost_estimate=pl.CostEstimate(
                flops=4 * T * rows_pad * width,
                transcendentals=T * rows_pad * k,
                bytes_accessed=4 * (T + 1) * rows_pad * width + out_bytes),
        )(cos_steps, static2d, ev)

    # Per-tile partial sums (one scalar per tile, broadcast over its block).
    return jnp.sum(out[:, 0, 0])


def _reference_loss(evolve_embs, static_emb, *, angle, discount,
                    sum_over_time=False):
    """Pure-JAX reference mirroring the PyTorch loop."""
    T = evolve_embs.shape[0]
    total = jnp.float32(0.0)
    loss = jnp.float32(0.0)
    for t in range(T):
        step = math.radians(float(angle)) * (t * float(discount) + 1.0)
        ev = evolve_embs[t]
        norm = jnp.maximum(jnp.sqrt(jnp.sum(ev * ev, axis=1, keepdims=True)),
                           1e-12)
        sim = jnp.sum(static_emb * (ev / norm), axis=1)
        diff = math.cos(step) - sim
        loss = jnp.sum(jnp.where(diff > 0, diff, 0.0))   # overwritten each t
        total = total + loss
    return total if sum_over_time else loss


if __name__ == "__main__":
    def _check(T, N, D, angle, discount, sum_over_time, key):
        k1, k2 = jax.random.split(key)
        evolve = jax.random.normal(k1, (T, N, D), dtype=jnp.float32)
        static = jax.random.normal(k2, (N, D), dtype=jnp.float32)
        static = static / jnp.linalg.norm(static, axis=1, keepdims=True)
        got = static_regularizer_loss(evolve, static, angle=angle,
                                      discount=discount,
                                      sum_over_time=sum_over_time)
        got = jax.block_until_ready(got)
        ref = _reference_loss(evolve, static, angle=angle, discount=discount,
                              sum_over_time=sum_over_time)
        assert jnp.allclose(got, ref, rtol=1e-5, atol=1e-5), \
            (T, N, D, sum_over_time, got, ref)

    key = jax.random.PRNGKey(0)
    keys = jax.random.split(key, 2)

    # Small-D fold path (k = 128/32 = 4), N padded to the tile grid + masked.
    _check(4, 8, 32, 10.0, 1, False, keys[0])   # faithful "last step wins"
    _check(4, 8, 32, 10.0, 1, True, keys[0])    # optional sum-over-time

    # Lane-native path (D = 128, k = 1), no padding, last-slice 3-D indexing.
    _check(3, 16, 128, 15.0, 0, False, keys[1])
    _check(3, 16, 128, 15.0, 0, True, keys[1])

    print("KERNEL_OK")
</pallas_src>

<mosaic_0001>
module attributes {stable_mosaic.version = 11 : i64} {
  func.func @kernel(%arg0: i32, %arg1: memref<8x128xf32, #tpu.memory_space<vmem>>, %arg2: memref<8x128xf32, #tpu.memory_space<vmem>>, %arg3: memref<1x8x128xf32, #tpu.memory_space<vmem>>) attributes {dimension_semantics = [#tpu.dimension_semantics<parallel>], iteration_bounds = array<i64: 1>, scalar_prefetch = 0 : i64, scratch_operands = 0 : i64, tpu.core_type = #tpu.core_type<tc>, window_params = [{transform_indices = @transform_0, window_bounds = array<i64: 8, 128>}, {transform_indices = @transform_1, window_bounds = array<i64: 8, 128>}, {transform_indices = @transform_2, window_bounds = array<i64: 1, 8, 128>}]} {
    %c0 = arith.constant 0 : index
    %c0_0 = arith.constant 0 : index
    %0 = vector.load %arg2[%c0, %c0_0] : memref<8x128xf32, #tpu.memory_space<vmem>>, vector<8x128xf32>
    %c0_1 = arith.constant 0 : index
    %c0_2 = arith.constant 0 : index
    %1 = vector.load %arg1[%c0_1, %c0_2] : memref<8x128xf32, #tpu.memory_space<vmem>>, vector<8x128xf32>
    %2 = arith.mulf %1, %0 : vector<8x128xf32>
    %3 = arith.mulf %0, %0 : vector<8x128xf32>
    %4 = tpu.iota {dimensions = array<i32: 0>} : vector<8x1xi32>
    %c8_i32 = arith.constant 8 : i32
    %5 = arith.muli %arg0, %c8_i32 : i32
    %6 = vector.broadcast %5 : i32 to vector<8x1xi32>
    %7 = arith.addi %4, %6 : vector<8x1xi32>
    %8 = vector.extract_strided_slice %2 {offsets = [0, 0], sizes = [8, 32], strides = [1, 1]} : vector<8x128xf32> to vector<8x32xf32>
    %cst = arith.constant dense<0.000000e+00> : vector<8xf32>
    %9 = vector.multi_reduction <add>, %8, %cst [1] : vector<8x32xf32> to vector<8xf32>
    %10 = vector.shape_cast %9 : vector<8xf32> to vector<8x1xf32>
    %11 = vector.extract_strided_slice %3 {offsets = [0, 0], sizes = [8, 32], strides = [1, 1]} : vector<8x128xf32> to vector<8x32xf32>
    %cst_3 = arith.constant dense<0.000000e+00> : vector<8xf32>
    %12 = vector.multi_reduction <add>, %11, %cst_3 [1] : vector<8x32xf32> to vector<8xf32>
    %13 = vector.shape_cast %12 : vector<8xf32> to vector<8x1xf32>
    %cst_4 = arith.constant 1.000000e-24 : f32
    %14 = vector.broadcast %cst_4 : f32 to vector<8x1xf32>
    %15 = arith.maximumf %13, %14 : vector<8x1xf32>
    %16 = math.rsqrt %15 : vector<8x1xf32>
    %17 = arith.mulf %10, %16 : vector<8x1xf32>
    %cst_5 = arith.constant 0.766044437 : f32
    %18 = vector.broadcast %cst_5 : f32 to vector<8x1xf32>
    %19 = arith.subf %18, %17 : vector<8x1xf32>
    %cst_6 = arith.constant 0.000000e+00 : f32
    %20 = vector.broadcast %cst_6 : f32 to vector<8x1xf32>
    %21 = arith.maximumf %19, %20 : vector<8x1xf32>
    %c4_i32 = arith.constant 4 : i32
    %22 = vector.broadcast %c4_i32 : i32 to vector<8x1xi32>
    %23 = arith.muli %7, %22 : vector<8x1xi32>
    %c0_i32 = arith.constant 0 : i32
    %24 = vector.broadcast %c0_i32 : i32 to vector<8x1xi32>
    %25 = arith.addi %23, %24 : vector<8x1xi32>
    %c8_i32_7 = arith.constant 8 : i32
    %26 = vector.broadcast %c8_i32_7 : i32 to vector<8x1xi32>
    %27 = arith.cmpi slt, %25, %26 : vector<8x1xi32>
    %cst_8 = arith.constant 0.000000e+00 : f32
    %28 = vector.broadcast %cst_8 : f32 to vector<8x1xf32>
    %29 = arith.select %27, %21, %28 : vector<8x1xi1>, vector<8x1xf32>
    %30 = vector.shape_cast %29 : vector<8x1xf32> to vector<1x8x1xf32>
    %cst_9 = arith.constant dense<0.000000e+00> : vector<1xf32>
    %31 = vector.multi_reduction <add>, %30, %cst_9 [1, 2] : vector<1x8x1xf32> to vector<1xf32>
    %32 = vector.shape_cast %31 : vector<1xf32> to vector<1x1x1xf32>
    %33 = vector.extract %32[0, 0, 0] : f32 from vector<1x1x1xf32>
    %cst_10 = arith.constant 0.000000e+00 : f32
    %34 = arith.addf %cst_10, %33 : f32
    %35 = vector.extract_strided_slice %2 {offsets = [0, 32], sizes = [8, 32], strides = [1, 1]} : vector<8x128xf32> to vector<8x32xf32>
    %cst_11 = arith.constant dense<0.000000e+00> : vector<8xf32>
    %36 = vector.multi_reduction <add>, %35, %cst_11 [1] : vector<8x32xf32> to vector<8xf32>
    %37 = vector.shape_cast %36 : vector<8xf32> to vector<8x1xf32>
    %38 = vector.extract_strided_slice %3 {offsets = [0, 32], sizes = [8, 32], strides = [1, 1]} : vector<8x128xf32> to vector<8x32xf32>
    %cst_12 = arith.constant dense<0.000000e+00> : vector<8xf32>
    %39 = vector.multi_reduction <add>, %38, %cst_12 [1] : vector<8x32xf32> to vector<8xf32>
    %40 = vector.shape_cast %39 : vector<8xf32> to vector<8x1xf32>
    %cst_13 = arith.constant 1.000000e-24 : f32
    %41 = vector.broadcast %cst_13 : f32 to vector<8x1xf32>
    %42 = arith.maximumf %40, %41 : vector<8x1xf32>
    %43 = math.rsqrt %42 : vector<8x1xf32>
    %44 = arith.mulf %37, %43 : vector<8x1xf32>
    %cst_14 = arith.constant 0.766044437 : f32
    %45 = vector.broadcast %cst_14 : f32 to vector<8x1xf32>
    %46 = arith.subf %45, %44 : vector<8x1xf32>
    %cst_15 = arith.constant 0.000000e+00 : f32
    %47 = vector.broadcast %cst_15 : f32 to vector<8x1xf32>
    %48 = arith.maximumf %46, %47 : vector<8x1xf32>
    %c4_i32_16 = arith.constant 4 : i32
    %49 = vector.broadcast %c4_i32_16 : i32 to vector<8x1xi32>
    %50 = arith.muli %7, %49 : vector<8x1xi32>
    %c1_i32 = arith.constant 1 : i32
    %51 = vector.broadcast %c1_i32 : i32 to vector<8x1xi32>
    %52 = arith.addi %50, %51 : vector<8x1xi32>
    %c8_i32_17 = arith.constant 8 : i32
    %53 = vector.broadcast %c8_i32_17 : i32 to vector<8x1xi32>
    %54 = arith.cmpi slt, %52, %53 : vector<8x1xi32>
    %cst_18 = arith.constant 0.000000e+00 : f32
    %55 = vector.broadcast %cst_18 : f32 to vector<8x1xf32>
    %56 = arith.select %54, %48, %55 : vector<8x1xi1>, vector<8x1xf32>
    %57 = vector.shape_cast %56 : vector<8x1xf32> to vector<1x8x1xf32>
    %cst_19 = arith.constant dense<0.000000e+00> : vector<1xf32>
    %58 = vector.multi_reduction <add>, %57, %cst_19 [1, 2] : vector<1x8x1xf32> to vector<1xf32>
    %59 = vector.shape_cast %58 : vector<1xf32> to vector<1x1x1xf32>
    %60 = vector.extract %59[0, 0, 0] : f32 from vector<1x1x1xf32>
    %61 = arith.addf %34, %60 : f32
    %62 = vector.extract_strided_slice %2 {offsets = [0, 64], sizes = [8, 32], strides = [1, 1]} : vector<8x128xf32> to vector<8x32xf32>
    %cst_20 = arith.constant dense<0.000000e+00> : vector<8xf32>
    %63 = vector.multi_reduction <add>, %62, %cst_20 [1] : vector<8x32xf32> to vector<8xf32>
    %64 = vector.shape_cast %63 : vector<8xf32> to vector<8x1xf32>
    %65 = vector.extract_strided_slice %3 {offsets = [0, 64], sizes = [8, 32], strides = [1, 1]} : vector<8x128xf32> to vector<8x32xf32>
    %cst_21 = arith.constant dense<0.000000e+00> : vector<8xf32>
    %66 = vector.multi_reduction <add>, %65, %cst_21 [1] : vector<8x32xf32> to vector<8xf32>
    %67 = vector.shape_cast %66 : vector<8xf32> to vector<8x1xf32>
    %cst_22 = arith.constant 1.000000e-24 : f32
    %68 = vector.broadcast %cst_22 : f32 to vector<8x1xf32>
    %69 = arith.maximumf %67, %68 : vector<8x1xf32>
    %70 = math.rsqrt %69 : vector<8x1xf32>
    %71 = arith.mulf %64, %70 : vector<8x1xf32>
    %cst_23 = arith.constant 0.766044437 : f32
    %72 = vector.broadcast %cst_23 : f32 to vector<8x1xf32>
    %73 = arith.subf %72, %71 : vector<8x1xf32>
    %cst_24 = arith.constant 0.000000e+00 : f32
    %74 = vector.broadcast %cst_24 : f32 to vector<8x1xf32>
    %75 = arith.maximumf %73, %74 : vector<8x1xf32>
    %c4_i32_25 = arith.constant 4 : i32
    %76 = vector.broadcast %c4_i32_25 : i32 to vector<8x1xi32>
    %77 = arith.muli %7, %76 : vector<8x1xi32>
    %c2_i32 = arith.constant 2 : i32
    %78 = vector.broadcast %c2_i32 : i32 to vector<8x1xi32>
    %79 = arith.addi %77, %78 : vector<8x1xi32>
    %c8_i32_26 = arith.constant 8 : i32
    %80 = vector.broadcast %c8_i32_26 : i32 to vector<8x1xi32>
    %81 = arith.cmpi slt, %79, %80 : vector<8x1xi32>
    %cst_27 = arith.constant 0.000000e+00 : f32
    %82 = vector.broadcast %cst_27 : f32 to vector<8x1xf32>
    %83 = arith.select %81, %75, %82 : vector<8x1xi1>, vector<8x1xf32>
    %84 = vector.shape_cast %83 : vector<8x1xf32> to vector<1x8x1xf32>
    %cst_28 = arith.constant dense<0.000000e+00> : vector<1xf32>
    %85 = vector.multi_reduction <add>, %84, %cst_28 [1, 2] : vector<1x8x1xf32> to vector<1xf32>
    %86 = vector.shape_cast %85 : vector<1xf32> to vector<1x1x1xf32>
    %87 = vector.extract %86[0, 0, 0] : f32 from vector<1x1x1xf32>
    %88 = arith.addf %61, %87 : f32
    %89 = vector.extract_strided_slice %2 {offsets = [0, 96], sizes = [8, 32], strides = [1, 1]} : vector<8x128xf32> to vector<8x32xf32>
    %cst_29 = arith.constant dense<0.000000e+00> : vector<8xf32>
    %90 = vector.multi_reduction <add>, %89, %cst_29 [1] : vector<8x32xf32> to vector<8xf32>
    %91 = vector.shape_cast %90 : vector<8xf32> to vector<8x1xf32>
    %92 = vector.extract_strided_slice %3 {offsets = [0, 96], sizes = [8, 32], strides = [1, 1]} : vector<8x128xf32> to vector<8x32xf32>
    %cst_30 = arith.constant dense<0.000000e+00> : vector<8xf32>
    %93 = vector.multi_reduction <add>, %92, %cst_30 [1] : vector<8x32xf32> to vector<8xf32>
    %94 = vector.shape_cast %93 : vector<8xf32> to vector<8x1xf32>
    %cst_31 = arith.constant 1.000000e-24 : f32
    %95 = vector.broadcast %cst_31 : f32 to vector<8x1xf32>
    %96 = arith.maximumf %94, %95 : vector<8x1xf32>
    %97 = math.rsqrt %96 : vector<8x1xf32>
    %98 = arith.mulf %91, %97 : vector<8x1xf32>
    %cst_32 = arith.constant 0.766044437 : f32
    %99 = vector.broadcast %cst_32 : f32 to vector<8x1xf32>
    %100 = arith.subf %99, %98 : vector<8x1xf32>
    %cst_33 = arith.constant 0.000000e+00 : f32
    %101 = vector.broadcast %cst_33 : f32 to vector<8x1xf32>
    %102 = arith.maximumf %100, %101 : vector<8x1xf32>
    %c4_i32_34 = arith.constant 4 : i32
    %103 = vector.broadcast %c4_i32_34 : i32 to vector<8x1xi32>
    %104 = arith.muli %7, %103 : vector<8x1xi32>
    %c3_i32 = arith.constant 3 : i32
    %105 = vector.broadcast %c3_i32 : i32 to vector<8x1xi32>
    %106 = arith.addi %104, %105 : vector<8x1xi32>
    %c8_i32_35 = arith.constant 8 : i32
    %107 = vector.broadcast %c8_i32_35 : i32 to vector<8x1xi32>
    %108 = arith.cmpi slt, %106, %107 : vector<8x1xi32>
    %cst_36 = arith.constant 0.000000e+00 : f32
    %109 = vector.broadcast %cst_36 : f32 to vector<8x1xf32>
    %110 = arith.select %108, %102, %109 : vector<8x1xi1>, vector<8x1xf32>
    %111 = vector.shape_cast %110 : vector<8x1xf32> to vector<1x8x1xf32>
    %cst_37 = arith.constant dense<0.000000e+00> : vector<1xf32>
    %112 = vector.multi_reduction <add>, %111, %cst_37 [1, 2] : vector<1x8x1xf32> to vector<1xf32>
    %113 = vector.shape_cast %112 : vector<1xf32> to vector<1x1x1xf32>
    %114 = vector.extract %113[0, 0, 0] : f32 from vector<1x1x1xf32>
    %115 = arith.addf %88, %114 : f32
    %116 = vector.broadcast %115 : f32 to vector<1x8x128xf32>
    %c0_38 = arith.constant 0 : index
    %c0_39 = arith.constant 0 : index
    %c0_40 = arith.constant 0 : index
    %117 = vector.load %arg3[%c0_38, %c0_39, %c0_40] : memref<1x8x128xf32, #tpu.memory_space<vmem>>, vector<1x8x128xf32>
    tpu.vector_store %arg3[%c0_38, %c0_39, %c0_40], %116 {strides = array<i32>} : memref<1x8x128xf32, #tpu.memory_space<vmem>>, vector<1x8x128xf32>,
    return
  }
  func.func @transform_0(%arg0: i32) -> (i32, i32) {
    %c0_i32 = arith.constant 0 : i32
    %c0_i32_0 = arith.constant 0 : i32
    return %arg0, %c0_i32 : i32, i32
  }
  func.func @transform_1(%arg0: i32) -> (i32, i32) {
    %c0_i32 = arith.constant 0 : i32
    %c0_i32_0 = arith.constant 0 : i32
    return %arg0, %c0_i32 : i32, i32
  }
  func.func @transform_2(%arg0: i32) -> (i32, i32, i32) {
    %c0_i32 = arith.constant 0 : i32
    %c0_i32_0 = arith.constant 0 : i32
    %c0_i32_1 = arith.constant 0 : i32
    return %arg0, %c0_i32, %c0_i32_0 : i32, i32, i32
  }
}

</mosaic_0001>

<llo_original>
// kernel: tpu_custom_call.1
$region0: #{tpu_custom_call.1}
  #allocation0 [shape = 'u32[]', space=smem, size = 0x4, offset = 0x4, fixed_abs, tag = 'smem constant byte address 0x4 - core index']
  #allocation1 [shape = 'u32[144,128]{1,0:T(1,128)}', space=vmem, size = 0x12000, scoped, tag = 'internal scratch']
  %s0 = inlined_call_operand.hbm [shape: f32[8,128], index: 0, kind: input, shape index: {}]
  %s1 = inlined_call_operand.hbm [shape: f32[8,128], index: 1, kind: input, shape index: {}]
  %s2 = inlined_call_operand.hbm [shape: f32[1,8,128], index: 2, kind: output, shape index: {}]
  %s3 = sld [smem:[#allocation0]]
  $region26: #{tpu_custom_call.1} parent=0
    _
  %s5 = ssub.s32 1, %s3
  %s6 = scalar_select 0, %s5, %s3
  $region1: #{tpu_custom_call.1} parent=0
    #allocation2 [shape = 'u8[4096]{0}', space=vmem, size = 0x1000, scoped, tag = 'input window, operand 0, single buffered']
    #allocation3 [shape = 's32[1]{0}', space=sflag, size = 0x4, scoped, tag = 'scoped memory for tpu_custom_call.1']
    #allocation4 [shape = 's32[1]{0}', space=sflag, size = 0x4, scoped, tag = 'scoped memory for tpu_custom_call.1']
    #allocation5 [shape = 'u8[4096]{0}', space=vmem, size = 0x1000, scoped, tag = 'input window, operand 1, single buffered']
    #allocation6 [shape = 's32[1]{0}', space=sflag, size = 0x4, scoped, tag = 'scoped memory for tpu_custom_call.1']
    #allocation7 [shape = 'u8[4096]{0}', space=vmem, size = 0x1000, scoped, tag = 'output window, operand 0, single buffered']
    %7 = vsyncpa [#allocation3], 0
    %8 = vsyncpa [#allocation6], 0
    %9 = vsyncpa [#allocation4], 0
    // Predicated region
    $region2: #{tpu_custom_call.1} parent=1 // pred_check
      _
    $region3: #{tpu_custom_call.1} parent=1 // pred_check_branch
      %11 = sbr.rel (0) target = $region5
    $region4: #{tpu_custom_call.1} parent=1 // pred_region
      %s13 = ssub.s32 128, 128
      %14 = vsyncadd [#allocation3], %s13
      %s16 = sshll.u32 [#allocation2], 4
      %s17 = int_to_ptr.vmem [resolvable:$true] %s16
      %19 = dma.hbm_to_vmem [thread:$0]  %s0, 128, %s17, [#allocation3]
    $region5: #{tpu_custom_call.1} parent=1 // pred_fallthru
      _
    // Predicated region
    $region6: #{tpu_custom_call.1} parent=1 // pred_check
      _
    $region7: #{tpu_custom_call.1} parent=1 // pred_check_branch
      %21 = sbr.rel (0) target = $region9
    $region8: #{tpu_custom_call.1} parent=1 // pred_region
      %s23 = ssub.s32 128, 128
      %24 = vsyncadd [#allocation6], %s23
      %s26 = sshll.u32 [#allocation5], 4
      %s27 = int_to_ptr.vmem [resolvable:$true] %s26
      %29 = dma.hbm_to_vmem [thread:$0]  %s1, 128, %s27, [#allocation6]
    $region9: #{tpu_custom_call.1} parent=1 // pred_fallthru
      _
    // Predicated region
    $region10: #{tpu_custom_call.1} parent=1 // pred_check
      _
    $region11: #{tpu_custom_call.1} parent=1 // pred_check_branch
      %31 = sbr.rel (0) target = $region13
    $region12: #{tpu_custom_call.1} parent=1 // pred_region
      %32 = dma.done [#allocation3], 128
    $region13: #{tpu_custom_call.1} parent=1 // pred_fallthru
      _
    // Predicated region
    $region14: #{tpu_custom_call.1} parent=1 // pred_check
      _
    $region15: #{tpu_custom_call.1} parent=1 // pred_check_branch
      %34 = sbr.rel (0) target = $region17
    $region16: #{tpu_custom_call.1} parent=1 // pred_region
      %35 = dma.done [#allocation6], 128
    $region17: #{tpu_custom_call.1} parent=1 // pred_fallthru
      _
    %v36 = vld [vmem:[#allocation5] sm:$0xff]
    %v37 = vld [vmem:[#allocation2] sm:$0xff]
    %v38 = vmul.f32 %v37, %v36
    %v39 = vmul.f32 %v36, %v36
    %v40 = vlaneseq
    %v41 = vshrl.u32 %v40, 7
    %s42 = smul.u32 0, 8
    %v43 = vstv %s42
    %v44 = vadd.s32 %v41, %v43
    %vm45 = vcmask 261120
    %v46 = vsel %vm45, %v38, 0.0
    %47 = vadd.xlane.f32.xlu0 %v46
    %v48 = vpop.xlane.xlu0 %47
    %v49 = vsel %vm45, %v39, 0.0
    %50 = vadd.xlane.f32.xlu0 %v49
    %v51 = vpop.xlane.xlu0 %50
    %v52 = vmax.f32 %v51, 1e-24
    %v53 = vrsqrt.pop %v52
    %v54 = vmul.f32 %v48, %v53
    %v55 = vsub.f32 0.76604444, %v54
    %v56 = vmax.f32 %v55, 0.0
    %v57 = vmul.u32 %v44, 4
    %vm58 = vcmp.lt.s32.totalorder %v57, 8
    %v59 = vsel %vm58, %v56, 0.0
    %vm60 = vcmask 7168
    %v61 = vsel %vm60, %v59, 0.0
    %62 = vadd.xlane.f32.xlu0 %v61
    %v63 = vpop.xlane.xlu0 %62
    %v64 = vrot.slane %v63, 4
    %v65 = vadd.f32 %v63, %v64
    %v66 = vrot.slane %v65, 2
    %v67 = vadd.f32 %v65, %v66
    %v68 = vrot.slane %v67, 1
    %v69 = vadd.f32 %v67, %v68
    %s70 = vtos %v69
    %s71 = sadd.f32 %s70, 0.0
    %73 = vrot.lane.b32.xlu0 %v38, 96
    %v74 = vpop.permute.xlu0 %73
    %v76 = vsel %vm45, %v74, 0.0
    %77 = vadd.xlane.f32.xlu0 %v76
    %v78 = vpop.xlane.xlu0 %77
    %80 = vrot.lane.b32.xlu0 %v39, 96
    %v81 = vpop.permute.xlu0 %80
    %v83 = vsel %vm45, %v81, 0.0
    %84 = vadd.xlane.f32.xlu0 %v83
    %v85 = vpop.xlane.xlu0 %84
    %v86 = vmax.f32 %v85, 1e-24
    %v87 = vrsqrt.pop %v86
    %v88 = vmul.f32 %v78, %v87
    %v89 = vsub.f32 0.76604444, %v88
    %v90 = vmax.f32 %v89, 0.0
    %v91 = vadd.s32 %v57, 1
    %vm92 = vcmp.lt.s32.totalorder %v91, 8
    %v93 = vsel %vm92, %v90, 0.0
    %v94 = vsel %vm60, %v93, 0.0
    %95 = vadd.xlane.f32.xlu0 %v94
    %v96 = vpop.xlane.xlu0 %95
    %v97 = vrot.slane %v96, 4
    %v98 = vadd.f32 %v96, %v97
    %v99 = vrot.slane %v98, 2
    %v100 = vadd.f32 %v98, %v99
    %v101 = vrot.slane %v100, 1
    %v102 = vadd.f32 %v100, %v101
    %s103 = vtos %v102
    %s104 = sadd.f32 %s71, %s103
    %105 = vrot.lane.b32.xlu0 %v38, 64
    %v106 = vpop.permute.xlu0 %105
    %v108 = vsel %vm45, %v106, 0.0
    %109 = vadd.xlane.f32.xlu0 %v108
    %v110 = vpop.xlane.xlu0 %109
    %111 = vrot.lane.b32.xlu0 %v39, 64
    %v112 = vpop.permute.xlu0 %111
    %v114 = vsel %vm45, %v112, 0.0
    %115 = vadd.xlane.f32.xlu0 %v114
    %v116 = vpop.xlane.xlu0 %115
    %v117 = vmax.f32 %v116, 1e-24
    %v118 = vrsqrt.pop %v117
    %v119 = vmul.f32 %v110, %v118
    %v120 = vsub.f32 0.76604444, %v119
    %v121 = vmax.f32 %v120, 0.0
    %v122 = vadd.s32 %v57, 2
    %vm123 = vcmp.lt.s32.totalorder %v122, 8
    %v124 = vsel %vm123, %v121, 0.0
    %v125 = vsel %vm60, %v124, 0.0
    %126 = vadd.xlane.f32.xlu0 %v125
    %v127 = vpop.xlane.xlu0 %126
    %v128 = vrot.slane %v127, 4
    %v129 = vadd.f32 %v127, %v128
    %v130 = vrot.slane %v129, 2
    %v131 = vadd.f32 %v129, %v130
    %v132 = vrot.slane %v131, 1
    %v133 = vadd.f32 %v131, %v132
    %s134 = vtos %v133
    %s135 = sadd.f32 %s104, %s134
    %136 = vrot.lane.b32.xlu0 %v38, 32
    %v137 = vpop.permute.xlu0 %136
    %v139 = vsel %vm45, %v137, 0.0
    %140 = vadd.xlane.f32.xlu0 %v139
    %v141 = vpop.xlane.xlu0 %140
    %142 = vrot.lane.b32.xlu0 %v39, 32
    %v143 = vpop.permute.xlu0 %142
    %v145 = vsel %vm45, %v143, 0.0
    %146 = vadd.xlane.f32.xlu0 %v145
    %v147 = vpop.xlane.xlu0 %146
    %v148 = vmax.f32 %v147, 1e-24
    %v149 = vrsqrt.pop %v148
    %v150 = vmul.f32 %v141, %v149
    %v151 = vsub.f32 0.76604444, %v150
    %v152 = vmax.f32 %v151, 0.0
    %v153 = vadd.s32 %v57, 3
    %vm154 = vcmp.lt.s32.totalorder %v153, 8
    %v155 = vsel %vm154, %v152, 0.0
    %v156 = vsel %vm60, %v155, 0.0
    %157 = vadd.xlane.f32.xlu0 %v156
    %v158 = vpop.xlane.xlu0 %157
    %v159 = vrot.slane %v158, 4
    %v160 = vadd.f32 %v158, %v159
    %v161 = vrot.slane %v160, 2
    %v162 = vadd.f32 %v160, %v161
    %v163 = vrot.slane %v162, 1
    %v164 = vadd.f32 %v162, %v163
    %s165 = vtos %v164
    %s166 = sadd.f32 %s135, %s165
    %v167 = vstv %s166
    %168 = vst [vmem:[#allocation7] sm:$0xff] %v167
    // Predicated region
    $region18: #{tpu_custom_call.1} parent=1 // pred_check
      _
    $region19: #{tpu_custom_call.1} parent=1 // pred_check_branch
      %170 = sbr.rel (0) target = $region21
    $region20: #{tpu_custom_call.1} parent=1 // pred_region
      %s172 = ssub.s32 128, 128
      %173 = vsyncadd [#allocation4], %s172
      %s175 = sshll.u32 [#allocation7], 4
      %s176 = int_to_ptr.vmem [resolvable:$true] %s175
      %178 = dma.vmem_to_hbm [thread:$0]  %s176, 128, %s2, [#allocation4]
    $region21: #{tpu_custom_call.1} parent=1 // pred_fallthru
      _
    // Predicated region
    $region22: #{tpu_custom_call.1} parent=1 // pred_check
      _
    $region23: #{tpu_custom_call.1} parent=1 // pred_check_branch
      %180 = sbr.rel (0) target = $region25
    $region24: #{tpu_custom_call.1} parent=1 // pred_region
      %181 = dma.done [#allocation4], 128
    $region25: #{tpu_custom_call.1} parent=1 // pred_fallthru
      _
    %182 = vsyncpa [#allocation3], 1
    %183 = vsyncpa [#allocation6], 1
    %184 = vsyncpa [#allocation4], 1

</llo_original>
